<compile_context>
chip_gen: v7x
topology: tpu7x:2x2x1
jax: 0.10.0
libtpu: 0.0.40
codegen_flags: <defaults>
</compile_context>

<pallas_src>
import math
import functools

import jax
import jax.numpy as jnp
from jax.experimental import pallas as pl
from jax.experimental.pallas import tpu as pltpu


def _round_up(x, m):
    return ((x + m - 1) // m) * m


def _pick_tn(n_padded, tn_max):
    """Largest multiple of 128 that divides n_padded and is <= tn_max."""
    q = n_padded // 128
    best = 1
    for d in range(1, q + 1):
        if q % d == 0 and d * 128 <= tn_max:
            best = d
    return best * 128


def _linear_kernel(x_ref, w_ref, b_ref, o_ref, *, precision):
    # (tm, K) @ (K, tn) on the MXU with f32 accumulation; bias added in f32,
    # then cast to the output dtype (lane-dense, unmasked store).
    acc = jnp.dot(x_ref[...], w_ref[...],
                  preferred_element_type=jnp.float32,
                  precision=precision)
    o_ref[...] = (acc + b_ref[...].astype(jnp.float32)).astype(o_ref.dtype)


def pad_linear_params(w_t, b):
    """One-time lane padding of the params (hoisted out of the forward path)."""
    _, N = w_t.shape
    Np = _round_up(N, 128)
    b = b.reshape(1, -1)
    if Np != N:
        w_t = jnp.pad(w_t, ((0, 0), (0, Np - N)))
        b = jnp.pad(b, ((0, 0), (0, Np - N)))
    return w_t, b


def categorical_forward(x, w_t, b, *, num_outputs=None, tm_max=512,
                        tn_max=512, precision=None):
    """Forward of Categorical: logits = x @ W^T + b.

    x:   (B, num_inputs)
    w_t: (num_inputs, Np)  weight pre-transposed; ideally pre-padded to 128
    b:   (Np,) or (1, Np)
    num_outputs: logical number of outputs (defaults to w_t.shape[1])
    """
    B, K = x.shape
    Kw, Nw = w_t.shape
    assert Kw == K
    b = b.reshape(1, -1)
    N = num_outputs if num_outputs is not None else Nw

    # Lane-dense params (normally pre-padded at init; fallback pad here).
    Np = _round_up(Nw, 128)
    if Np != Nw:
        w_t = jnp.pad(w_t, ((0, 0), (0, Np - Nw)))
        b = jnp.pad(b, ((0, 0), (0, Np - Nw)))

    # Batch: pad only to the sublane multiple (8); ragged last tile is fine
    # (Pallas masks out-of-bounds writes), so no padding to a multiple of tm.
    Bp = _round_up(B, 8)
    x_p = jnp.pad(x, ((0, Bp - B), (0, 0))) if Bp != B else x

    # >= 2 batch steps whenever possible so the "parallel" axis can be
    # sharded across v7x's two TensorCores (neutral on v5e/v6e).
    if Bp > 8:
        tm = min(tm_max, _round_up(pl.cdiv(Bp, 2), 8))
    else:
        tm = Bp
    grid_b = pl.cdiv(Bp, tm)

    # Output-column tiling (weight-bound shapes); tn always divides Np.
    tn = _pick_tn(Np, tn_max)
    grid_n = Np // tn

    if grid_n == 1:
        # Weight/bias stay VMEM-resident across all grid steps -> single buffer.
        w_spec = pl.BlockSpec((K, Np), lambda i, j: (0, 0),
                              pipeline_mode=pl.Buffered(1))
        b_spec = pl.BlockSpec((1, Np), lambda i, j: (0, 0),
                              pipeline_mode=pl.Buffered(1))
        w_bufs = 1
    else:
        w_spec = pl.BlockSpec((K, tn), lambda i, j: (0, j))
        b_spec = pl.BlockSpec((1, tn), lambda i, j: (0, j))
        w_bufs = 2

    # VMEM budget from the actual buffers (+25% headroom), clamped.
    xi = jnp.dtype(x_p.dtype).itemsize
    wi = jnp.dtype(w_t.dtype).itemsize
    bi = jnp.dtype(b.dtype).itemsize
    vmem_bytes = (2 * tm * K * xi            # x tile, double-buffered
                  + 2 * tm * tn * xi         # out tile, double-buffered
                  + w_bufs * K * tn * wi     # weight
                  + w_bufs * tn * bi)        # bias
    vmem_limit = int(min(64 * 1024 * 1024,
                         max(32 * 1024 * 1024, int(vmem_bytes * 1.25))))

    out_p = pl.pallas_call(
        functools.partial(_linear_kernel, precision=precision),
        out_shape=jax.ShapeDtypeStruct((Bp, Np), x.dtype),
        grid=(grid_b, grid_n),
        in_specs=[
            pl.BlockSpec((tm, K), lambda i, j: (i, 0)),   # x: tiled over batch
            w_spec,                                       # W^T
            b_spec,                                       # bias
        ],
        out_specs=pl.BlockSpec((tm, tn), lambda i, j: (i, j)),
        compiler_params=pltpu.CompilerParams(
            dimension_semantics=("parallel", "parallel"),
            vmem_limit_bytes=vmem_limit),
    )(x_p, w_t, b)

    # Slice only when padding was actually added.
    if Bp != B or Np != N:
        return out_p[:B, :N]
    return out_p


categorical_forward_jit = jax.jit(
    categorical_forward,
    static_argnames=("num_outputs", "tm_max", "tn_max", "precision"))


def init_linear_params(key, num_inputs, num_outputs, dtype=jnp.float32):
    # Matches nn.Linear's default init: U(-1/sqrt(fan_in), 1/sqrt(fan_in)).
    # Weight kept pre-transposed as (num_inputs, num_outputs).
    kw, kb = jax.random.split(key)
    bound = 1.0 / math.sqrt(num_inputs)
    w_t = jax.random.uniform(kw, (num_inputs, num_outputs), dtype, -bound, bound)
    b = jax.random.uniform(kb, (1, num_outputs), dtype, -bound, bound)
    return w_t, b


if __name__ == "__main__":
    key = jax.random.PRNGKey(0)
    k_x, k_p = jax.random.split(key)

    batch = 8
    num_inputs = 32
    num_outputs = 16

    x = jax.random.normal(k_x, (batch, num_inputs), jnp.float32)
    w_t, b = init_linear_params(k_p, num_inputs, num_outputs)
    # Pad the params to a lane multiple once, at init time (hoisted out of
    # the per-call path).
    w_p, b_p = pad_linear_params(w_t, b)

    out = categorical_forward_jit(x, w_p, b_p, num_outputs=num_outputs)
    jax.block_until_ready(out)

    # Sanity check against plain-JAX reference.
    ref = x @ w_t + b.reshape(1, -1)
    assert out.shape == (batch, num_outputs)
    assert jnp.allclose(out, ref, atol=1e-5, rtol=1e-5)

    print("KERNEL_OK")
</pallas_src>

<mosaic_0001>
module attributes {stable_mosaic.version = 11 : i64} {
  func.func @_linear_kernel(%arg0: i32, %arg1: i32, %arg2: memref<8x32xf32, #tpu.memory_space<vmem>>, %arg3: memref<32x128xf32, #tpu.memory_space<vmem>>, %arg4: memref<1x128xf32, #tpu.memory_space<vmem>>, %arg5: memref<8x128xf32, #tpu.memory_space<vmem>>) attributes {dimension_semantics = [#tpu.dimension_semantics<parallel>, #tpu.dimension_semantics<parallel>], iteration_bounds = array<i64: 1, 1>, scalar_prefetch = 0 : i64, scratch_operands = 0 : i64, tpu.core_type = #tpu.core_type<tc>, window_params = [{transform_indices = @transform_0, window_bounds = array<i64: 8, 32>}, {pipeline_mode = #tpu.pipeline_mode<synchronous>, transform_indices = @transform_1, window_bounds = array<i64: 32, 128>}, {pipeline_mode = #tpu.pipeline_mode<synchronous>, transform_indices = @transform_2, window_bounds = array<i64: 1, 128>}, {transform_indices = @transform_3, window_bounds = array<i64: 8, 128>}]} {
    %c0 = arith.constant 0 : index
    %c0_0 = arith.constant 0 : index
    %0 = vector.load %arg2[%c0, %c0_0] : memref<8x32xf32, #tpu.memory_space<vmem>>, vector<8x32xf32>
    %c0_1 = arith.constant 0 : index
    %c0_2 = arith.constant 0 : index
    %1 = vector.load %arg3[%c0_1, %c0_2] : memref<32x128xf32, #tpu.memory_space<vmem>>, vector<32x128xf32>
    %cst = arith.constant dense<0.000000e+00> : vector<8x128xf32>
    %2 = tpu.matmul %0, %1, %cst {dimension_numbers = #tpu.dot_dimension_numbers<[1], [0], [0], [1], [0, 0, 1, 1], [], []>} : vector<8x32xf32>, vector<32x128xf32>, vector<8x128xf32> -> vector<8x128xf32>
    %c0_3 = arith.constant 0 : index
    %c0_4 = arith.constant 0 : index
    %3 = vector.load %arg4[%c0_3, %c0_4] : memref<1x128xf32, #tpu.memory_space<vmem>>, vector<1x128xf32>
    %4 = vector.broadcast %3 : vector<1x128xf32> to vector<8x128xf32>
    %5 = arith.addf %2, %4 : vector<8x128xf32>
    %c0_5 = arith.constant 0 : index
    %c0_6 = arith.constant 0 : index
    %6 = vector.load %arg5[%c0_5, %c0_6] : memref<8x128xf32, #tpu.memory_space<vmem>>, vector<8x128xf32>
    tpu.vector_store %arg5[%c0_5, %c0_6], %5 {strides = array<i32>} : memref<8x128xf32, #tpu.memory_space<vmem>>, vector<8x128xf32>,
    return
  }
  func.func @transform_0(%arg0: i32, %arg1: i32) -> (i32, i32) {
    %c0_i32 = arith.constant 0 : i32
    %c0_i32_0 = arith.constant 0 : i32
    return %arg0, %c0_i32 : i32, i32
  }
  func.func @transform_1(%arg0: i32, %arg1: i32) -> (i32, i32) {
    %c0_i32 = arith.constant 0 : i32
    %c0_i32_0 = arith.constant 0 : i32
    %c0_i32_1 = arith.constant 0 : i32
    return %c0_i32, %c0_i32_0 : i32, i32
  }
  func.func @transform_2(%arg0: i32, %arg1: i32) -> (i32, i32) {
    %c0_i32 = arith.constant 0 : i32
    %c0_i32_0 = arith.constant 0 : i32
    %c0_i32_1 = arith.constant 0 : i32
    return %c0_i32, %c0_i32_0 : i32, i32
  }
  func.func @transform_3(%arg0: i32, %arg1: i32) -> (i32, i32) {
    %c0_i32 = arith.constant 0 : i32
    return %arg0, %arg1 : i32, i32
  }
}

</mosaic_0001>

<llo_original>
// kernel: categorical_forward.1
$region0: #{categorical_forward.1}
  #allocation0 [shape = 'u32[]', space=smem, size = 0x4, offset = 0x4, fixed_abs, tag = 'smem constant byte address 0x4 - core index']
  #allocation1 [shape = 'u32[144,128]{1,0:T(1,128)}', space=vmem, size = 0x12000, scoped, tag = 'internal scratch']
  %s0 = inlined_call_operand.hbm [shape: f32[8,32], index: 0, kind: input, shape index: {}]
  %s1 = inlined_call_operand.hbm [shape: f32[32,128], index: 1, kind: input, shape index: {}]
  %s2 = inlined_call_operand.vmem [shape: f32[1,128], index: 2, kind: input, shape index: {}]
  %s3 = inlined_call_operand.hbm [shape: f32[8,128], index: 3, kind: output, shape index: {}]
  %s4 = sld [smem:[#allocation0]]
  $region30: #{categorical_forward.1} parent=0
    _
  %s6 = ssub.s32 1, %s4
  %s7 = scalar_select 0, %s6, %s4
  $region1: #{categorical_forward.1} parent=0
    #allocation2 [shape = 'u8[4096]{0}', space=vmem, size = 0x1000, scoped, tag = 'input window, operand 0, single buffered']
    #allocation3 [shape = 's32[1]{0}', space=sflag, size = 0x4, scoped, tag = 'scoped memory for categorical_forward.1']
    #allocation4 [shape = 's32[1]{0}', space=sflag, size = 0x4, scoped, tag = 'scoped memory for categorical_forward.1']
    #allocation5 [shape = 'u8[16384]{0}', space=vmem, size = 0x4000, scoped, tag = 'input window, operand 1, single buffered']
    #allocation6 [shape = 's32[1]{0}', space=sflag, size = 0x4, scoped, tag = 'scoped memory for categorical_forward.1']
    #allocation7 [shape = 'u8[4096]{0}', space=vmem, size = 0x1000, scoped, tag = 'output window, operand 0, single buffered']
    %8 = vsyncpa [#allocation3], 0
    %9 = vsyncpa [#allocation6], 0
    %10 = vsyncpa [#allocation4], 0
    // Predicated region
    $region2: #{categorical_forward.1} parent=1 // pred_check
      _
    $region3: #{categorical_forward.1} parent=1 // pred_check_branch
      %12 = sbr.rel (0) target = $region5
    $region4: #{categorical_forward.1} parent=1 // pred_region
      %s14 = ssub.s32 128, 128
      %15 = vsyncadd [#allocation3], %s14
      %s17 = sshll.u32 [#allocation2], 4
      %s18 = int_to_ptr.vmem [resolvable:$true] %s17
      %20 = dma.hbm_to_vmem [thread:$0]  %s0, 128, %s18, [#allocation3]
    $region5: #{categorical_forward.1} parent=1 // pred_fallthru
      _
    // Predicated region
    $region6: #{categorical_forward.1} parent=1 // pred_check
      _
    $region7: #{categorical_forward.1} parent=1 // pred_check_branch
      %22 = sbr.rel (0) target = $region9
    $region8: #{categorical_forward.1} parent=1 // pred_region
      %s24 = ssub.s32 512, 512
      %25 = vsyncadd [#allocation6], %s24
      %s26 = sshll.u32 [#allocation5], 4
      %s27 = int_to_ptr.vmem [resolvable:$true] %s26
      %32 = dma.hbm_to_vmem [thread:$0]  %s1, 512, %s27, [#allocation6], 128, 128, 8
    $region9: #{categorical_forward.1} parent=1 // pred_fallthru
      _
    // Predicated region
    $region10: #{categorical_forward.1} parent=1 // pred_check
      _
    $region11: #{categorical_forward.1} parent=1 // pred_check_branch
      %34 = sbr.rel (0) target = $region13
    $region12: #{categorical_forward.1} parent=1 // pred_region
      _
    $region13: #{categorical_forward.1} parent=1 // pred_fallthru
      _
    // Predicated region
    $region14: #{categorical_forward.1} parent=1 // pred_check
      _
    $region15: #{categorical_forward.1} parent=1 // pred_check_branch
      %36 = sbr.rel (0) target = $region17
    $region16: #{categorical_forward.1} parent=1 // pred_region
      %37 = dma.done [#allocation3], 128
    $region17: #{categorical_forward.1} parent=1 // pred_fallthru
      _
    // Predicated region
    $region18: #{categorical_forward.1} parent=1 // pred_check
      _
    $region19: #{categorical_forward.1} parent=1 // pred_check_branch
      %39 = sbr.rel (0) target = $region21
    $region20: #{categorical_forward.1} parent=1 // pred_region
      %40 = dma.done [#allocation6], 512
    $region21: #{categorical_forward.1} parent=1 // pred_fallthru
      _
    %v41 = vld [vmem:[#allocation2] sm:$0xff]
    %v42 = vld [vmem:[#allocation5] sm:$0xff]
    %v43 = vld [vmem:[#allocation5 + $0x8] sm:$0xff]
    %v44 = vld [vmem:[#allocation5 + $0x10] sm:$0xff]
    %v45 = vld [vmem:[#allocation5 + $0x18] sm:$0xff]
    %v46 = vld [vmem:[%s2] sm:$0x1]
    %v48 = vlaneseq
    %v49 = vshrl.u32 %v48, 7
    %v50 = vsub.s32 0, %v49
    %v51 = vrot.slane %v46, %v50
    %vm53 = vcmask 261120
    %v55 = vsel %vm53, %v41, 0
    %57 = vmatprep.subr.mxu0 0.0
    %58 = vmatpush1.msra.mxu0 %v42
    %59 = vmatprep.subr.mxu0 0.0
    %60 = vmatpush1.msra.mxu0 %v43
    %61 = vmatprep.subr.mxu0 0.0
    %62 = vmatpush1.msra.mxu0 %v44
    %63 = vmatprep.subr.mxu0 0.0
    %64 = vmatpush1.msra.mxu0 %v45
    %65 = vmatprep.subr.mxu0 0.0
    %66 = vmatpush1.msra.mxu0 0.0
    %67 = vmatprep.subr.mxu0 0.0
    %68 = vmatpush1.msra.mxu0 0.0
    %69 = vmatprep.subr.mxu0 0.0
    %70 = vmatpush1.msra.mxu0 0.0
    %71 = vmatprep.subr.mxu0 0.0
    %72 = vmatpush1.msra.mxu0 0.0
    %73 = vmatprep.subr.mxu0 0.0
    %74 = vmatpush1.msra.mxu0 0.0
    %75 = vmatprep.subr.mxu0 0.0
    %76 = vmatpush1.msra.mxu0 0.0
    %77 = vmatprep.subr.mxu0 0.0
    %78 = vmatpush1.msra.mxu0 0.0
    %79 = vmatprep.subr.mxu0 0.0
    %80 = vmatpush1.msra.mxu0 0.0
    %81 = vmatprep.subr.mxu0 0.0
    %82 = vmatpush1.msra.mxu0 0.0
    %83 = vmatprep.subr.mxu0 0.0
    %84 = vmatpush1.msra.mxu0 0.0
    %85 = vmatprep.subr.mxu0 0.0
    %86 = vmatpush1.msra.mxu0 0.0
    %87 = vmatprep.subr.mxu0 0.0
    %88 = vmatpush1.msra.mxu0 0.0
    %89 = vmatprep.subr.mxu0 0.0
    %90 = vmatpush1.msra.mxu0 0.0
    %91 = vmatprep.subr.mxu0 0.0
    %92 = vmatpush1.msra.mxu0 0.0
    %93 = vmatprep.subr.mxu0 0.0
    %94 = vmatpush1.msra.mxu0 0.0
    %95 = vmatprep.subr.mxu0 0.0
    %96 = vmatpush1.msra.mxu0 0.0
    %97 = vmatprep.subr.mxu0 0.0
    %98 = vmatpush1.msra.mxu0 0.0
    %99 = vmatprep.subr.mxu0 0.0
    %100 = vmatpush1.msra.mxu0 0.0
    %101 = vmatprep.subr.mxu0 0.0
    %102 = vmatpush1.msra.mxu0 0.0
    %103 = vmatprep.subr.mxu0 0.0
    %104 = vmatpush1.msra.mxu0 0.0
    %105 = vmatprep.subr.mxu0 0.0
    %106 = vmatpush1.msra.mxu0 0.0
    %107 = vmatprep.subr.mxu0 0.0
    %108 = vmatpush1.msra.mxu0 0.0
    %109 = vmatprep.subr.mxu0 0.0
    %110 = vmatpush1.msra.mxu0 0.0
    %111 = vmatprep.subr.mxu0 0.0
    %112 = vmatpush1.msra.mxu0 0.0
    %113 = vmatprep.subr.mxu0 0.0
    %114 = vmatpush1.msra.mxu0 0.0
    %115 = vmatprep.subr.mxu0 0.0
    %116 = vmatpush1.msra.mxu0 0.0
    %117 = vmatprep.subr.mxu0 0.0
    %118 = vmatpush1.msra.mxu0 0.0
    %119 = vmatprep.subr.mxu0 0.0
    %120 = vmatpush1.msra.mxu0 0.0
    %121 = vmatprep.mubr.f32.mxu0 0.0
    %122 = vmatmul.mubr.f32.gmra.mrb[0].mxu0 %v55
    %v123 = vpop.f32.mrb[0].mxu0
    %v124 = vadd.f32 %v51, %v123
    %v125 = vpop.f32.mrb[0].mxu0
    %126 = vdwg.mxu0
    %127 = vst [vmem:[#allocation7] sm:$0xff] %v124
    // Predicated region
    $region22: #{categorical_forward.1} parent=1 // pred_check
      _
    $region23: #{categorical_forward.1} parent=1 // pred_check_branch
      %129 = sbr.rel (0) target = $region25
    $region24: #{categorical_forward.1} parent=1 // pred_region
      %s131 = ssub.s32 128, 128
      %132 = vsyncadd [#allocation4], %s131
      %s134 = sshll.u32 [#allocation7], 4
      %s135 = int_to_ptr.vmem [resolvable:$true] %s134
      %137 = dma.vmem_to_hbm [thread:$0]  %s135, 128, %s3, [#allocation4]
    $region25: #{categorical_forward.1} parent=1 // pred_fallthru
      _
    // Predicated region
    $region26: #{categorical_forward.1} parent=1 // pred_check
      _
    $region27: #{categorical_forward.1} parent=1 // pred_check_branch
      %139 = sbr.rel (0) target = $region29
    $region28: #{categorical_forward.1} parent=1 // pred_region
      %140 = dma.done [#allocation4], 128
    $region29: #{categorical_forward.1} parent=1 // pred_fallthru
      _
    %141 = vsyncpa [#allocation3], 1
    %142 = vsyncpa [#allocation6], 1
    %143 = vsyncpa [#allocation4], 1

</llo_original>
